<compile_context>
chip_gen: v6e
topology: v6e:2x2x1
jax: 0.10.0
libtpu: 0.0.40
codegen_flags: <defaults>
</compile_context>

<pallas_src>
import jax
import jax.numpy as jnp
from jax.experimental import pallas as pl
from jax.experimental.pallas import tpu as pltpu


# ----------------------------- kernels --------------------------------------


def _decoder_body(x_ref, w1_ref, b1_ref, w2_ref, out_ref, cut_ref=None):
    # x_ref: (TM, Din)  w1_ref: (Din, H)  b1_ref: (1, H)  w2_ref: (H, A)
    # cut_ref: (TM, A) streamed  or  (1, A) resident (broadcast over rows)
    h = jnp.dot(x_ref[...], w1_ref[...], preferred_element_type=jnp.float32)
    h = h + b1_ref[...]                      # bias broadcast over rows (f32)
    h = jnp.maximum(h, 0.1 * h)              # LeakyReLU(0.1), exact for slope<1
    s = jnp.dot(h.astype(w2_ref.dtype), w2_ref[...],
                preferred_element_type=jnp.float32)
    if cut_ref is not None:
        s = s + cut_ref[...]
    out_ref[...] = s.astype(out_ref.dtype)


def _kernel_cut(x_ref, w1_ref, b1_ref, w2_ref, cut_ref, out_ref):
    _decoder_body(x_ref, w1_ref, b1_ref, w2_ref, out_ref, cut_ref)


def _kernel_nocut(x_ref, w1_ref, b1_ref, w2_ref, out_ref):
    _decoder_body(x_ref, w1_ref, b1_ref, w2_ref, out_ref)


# ----------------------------- wrapper ---------------------------------------


def _round_up(x, m):
    return ((x + m - 1) // m) * m


def _choose_tm(m_pad, stream_row_bytes, resident_bytes):
    """Largest row tile whose double-buffered streamed tiles + resident weights
    stay under a v7x-safe VMEM budget, with >=2 grid steps for larger M."""
    budget = (28 << 20) - 2 * resident_bytes   # weights are double-buffered too
    budget = max(budget, 4 << 20)
    tm = 2048
    while tm > 8 and 2 * tm * stream_row_bytes > budget:
        tm //= 2
    # Give the v7x megacore (2 TensorCores) at least 2 parallel grid steps
    # once the problem is big enough to be worth splitting.
    if m_pad > 1024:
        tm = min(tm, _round_up((m_pad + 1) // 2, 8))
    return max(8, min(tm, m_pad))


@jax.jit
def decoder_forward(hidden_state, w1, b1, w2, cut=None):
    """hidden_state: (B, S, Din); w1: (Din, H); b1: (H,); w2: (H, A).

    Returns (B, S, A) action scores in hidden_state.dtype. `cut` (if given) is
    broadcastable to (B, S, A) and added to the scores.
    """
    B, S, Din = hidden_state.shape
    H = w1.shape[1]
    A = w2.shape[1]
    M = B * S
    M_pad = _round_up(M, 8)                    # sublane alignment only
    out_dtype = hidden_state.dtype

    x = hidden_state.reshape(M, Din)           # free (contiguous view)
    if M_pad != M:
        x = jnp.pad(x, ((0, M_pad - M), (0, 0)))

    b1_2d = b1.reshape(1, H)

    has_cut = cut is not None
    cut_resident = False
    cut2d = None
    if has_cut:
        if cut.size == A:
            # Per-action constant cut: keep it VMEM-resident, broadcast in-kernel.
            cut2d = cut.reshape(1, A)
            cut_resident = True
        else:
            if cut.shape != (B, S, A):
                cut = jnp.broadcast_to(cut, (B, S, A))   # rare fallback
            cut2d = cut.reshape(M, A)
            if M_pad != M:
                cut2d = jnp.pad(cut2d, ((0, M_pad - M), (0, 0)))

    # ---- tile / VMEM sizing from actual dtypes -----------------------------
    isz = lambda a: jnp.dtype(a.dtype).itemsize
    stream_row_bytes = Din * isz(x) + A * jnp.dtype(out_dtype).itemsize
    if has_cut and not cut_resident:
        stream_row_bytes += A * isz(cut2d)
    resident_bytes = Din * H * isz(w1) + H * isz(b1) + H * A * isz(w2)
    if has_cut and cut_resident:
        resident_bytes += A * isz(cut2d)

    tm = _choose_tm(M_pad, stream_row_bytes, resident_bytes)
    grid = (pl.cdiv(M_pad, tm),)

    vmem_needed = 2 * tm * stream_row_bytes + 2 * resident_bytes
    vmem_limit = int(min(max(2 * vmem_needed, 16 << 20), 48 << 20))

    compiler_params = pltpu.CompilerParams(
        dimension_semantics=("parallel",),
        vmem_limit_bytes=vmem_limit,
    )

    x_spec = pl.BlockSpec((tm, Din), lambda i: (i, 0))
    w1_spec = pl.BlockSpec((Din, H), lambda i: (0, 0))
    b1_spec = pl.BlockSpec((1, H), lambda i: (0, 0))
    w2_spec = pl.BlockSpec((H, A), lambda i: (0, 0))
    out_spec = pl.BlockSpec((tm, A), lambda i: (i, 0))
    out_shape = jax.ShapeDtypeStruct((M_pad, A), out_dtype)

    if has_cut:
        if cut_resident:
            cut_spec = pl.BlockSpec((1, A), lambda i: (0, 0))
        else:
            cut_spec = pl.BlockSpec((tm, A), lambda i: (i, 0))
        out = pl.pallas_call(
            _kernel_cut,
            out_shape=out_shape,
            grid_spec=pltpu.PrefetchScalarGridSpec(
                num_scalar_prefetch=0,
                grid=grid,
                in_specs=[x_spec, w1_spec, b1_spec, w2_spec, cut_spec],
                out_specs=out_spec,
            ),
            compiler_params=compiler_params,
        )(x, w1, b1_2d, w2, cut2d)
    else:
        out = pl.pallas_call(
            _kernel_nocut,
            out_shape=out_shape,
            grid_spec=pltpu.PrefetchScalarGridSpec(
                num_scalar_prefetch=0,
                grid=grid,
                in_specs=[x_spec, w1_spec, b1_spec, w2_spec],
                out_specs=out_spec,
            ),
            compiler_params=compiler_params,
        )(x, w1, b1_2d, w2)

    if M_pad != M:
        out = out[:M]
    return out.reshape(B, S, A)


# ----------------------------- reference & test ------------------------------


def _reference(hidden_state, w1, b1, w2, cut=None):
    h = hidden_state @ w1 + b1
    h = jnp.where(h > 0, h, 0.1 * h)
    s = h @ w2
    if cut is not None:
        s = s + cut
    return s


if __name__ == "__main__":
    # Config-implied shapes (small): lstm_hiddens=4 -> input_size = 4*2*4 = 32,
    # hidden_size = 32, len(vocab._id2ac) = 16, batch = 2, seq = 8.
    B, S = 2, 8
    lstm_hiddens = 4
    Din = lstm_hiddens * 2 * 4          # 32
    H = 32
    A = 16

    key = jax.random.PRNGKey(0)
    k_x, k_w1, k_b1, k_w2, k_cut = jax.random.split(key, 5)

    hidden_state = jax.random.normal(k_x, (B, S, Din), dtype=jnp.float32)
    # Deterministic parameter init (synthetic; NOT a checkpoint load).
    w1 = jax.random.normal(k_w1, (Din, H), dtype=jnp.float32) * 0.1
    b1 = jax.random.normal(k_b1, (H,), dtype=jnp.float32) * 0.1
    w2 = jax.random.normal(k_w2, (H, A), dtype=jnp.float32) * 0.1
    cut = jax.random.normal(k_cut, (B, S, A), dtype=jnp.float32) * 0.01

    # Full (B, S, A) cut: streamed, unpadded (tm, A) blocks.
    out = jax.block_until_ready(decoder_forward(hidden_state, w1, b1, w2, cut))
    ref = _reference(hidden_state, w1, b1, w2, cut)
    assert out.shape == (B, S, A)
    assert jnp.allclose(out, ref, atol=1e-5, rtol=1e-5), "mismatch vs reference"

    # cut=None path (dedicated kernel, no cut stream at all).
    out2 = jax.block_until_ready(decoder_forward(hidden_state, w1, b1, w2, None))
    ref2 = _reference(hidden_state, w1, b1, w2, None)
    assert jnp.allclose(out2, ref2, atol=1e-5, rtol=1e-5), "mismatch (no cut)"

    # Per-action constant cut: stays VMEM-resident, broadcast inside the kernel.
    cut_const = jax.random.normal(key, (1, 1, A), dtype=jnp.float32) * 0.01
    out3 = jax.block_until_ready(decoder_forward(hidden_state, w1, b1, w2, cut_const))
    ref3 = _reference(hidden_state, w1, b1, w2, cut_const)
    assert jnp.allclose(out3, ref3, atol=1e-5, rtol=1e-5), "mismatch (resident cut)"

    print("KERNEL_OK")
</pallas_src>

<mosaic_0001>
module attributes {stable_mosaic.version = 11 : i64} {
  func.func @_kernel_cut(%arg0: i32, %arg1: memref<16x32xf32, #tpu.memory_space<vmem>>, %arg2: memref<32x32xf32, #tpu.memory_space<vmem>>, %arg3: memref<1x32xf32, #tpu.memory_space<vmem>>, %arg4: memref<32x16xf32, #tpu.memory_space<vmem>>, %arg5: memref<16x16xf32, #tpu.memory_space<vmem>>, %arg6: memref<16x16xf32, #tpu.memory_space<vmem>>) attributes {dimension_semantics = [#tpu.dimension_semantics<parallel>], iteration_bounds = array<i64: 1>, scalar_prefetch = 0 : i64, scratch_operands = 0 : i64, tpu.core_type = #tpu.core_type<tc>, window_params = [{transform_indices = @transform_0, window_bounds = array<i64: 16, 32>}, {pipeline_mode = #tpu.pipeline_mode<synchronous>, transform_indices = @transform_1, window_bounds = array<i64: 32, 32>}, {pipeline_mode = #tpu.pipeline_mode<synchronous>, transform_indices = @transform_2, window_bounds = array<i64: 1, 32>}, {pipeline_mode = #tpu.pipeline_mode<synchronous>, transform_indices = @transform_3, window_bounds = array<i64: 32, 16>}, {transform_indices = @transform_4, window_bounds = array<i64: 16, 16>}, {transform_indices = @transform_5, window_bounds = array<i64: 16, 16>}]} {
    %c0 = arith.constant 0 : index
    %c0_0 = arith.constant 0 : index
    %0 = vector.load %arg1[%c0, %c0_0] : memref<16x32xf32, #tpu.memory_space<vmem>>, vector<16x32xf32>
    %c0_1 = arith.constant 0 : index
    %c0_2 = arith.constant 0 : index
    %1 = vector.load %arg2[%c0_1, %c0_2] : memref<32x32xf32, #tpu.memory_space<vmem>>, vector<32x32xf32>
    %cst = arith.constant dense<0.000000e+00> : vector<16x32xf32>
    %2 = tpu.matmul %0, %1, %cst {dimension_numbers = #tpu.dot_dimension_numbers<[1], [0], [0], [1], [0, 0, 1, 1], [], []>} : vector<16x32xf32>, vector<32x32xf32>, vector<16x32xf32> -> vector<16x32xf32>
    %c0_3 = arith.constant 0 : index
    %c0_4 = arith.constant 0 : index
    %3 = vector.load %arg3[%c0_3, %c0_4] : memref<1x32xf32, #tpu.memory_space<vmem>>, vector<1x32xf32>
    %4 = vector.broadcast %3 : vector<1x32xf32> to vector<16x32xf32>
    %5 = arith.addf %2, %4 : vector<16x32xf32>
    %cst_5 = arith.constant 1.000000e-01 : f32
    %6 = vector.broadcast %cst_5 : f32 to vector<16x32xf32>
    %7 = arith.mulf %6, %5 : vector<16x32xf32>
    %8 = arith.maximumf %5, %7 : vector<16x32xf32>
    %c0_6 = arith.constant 0 : index
    %c0_7 = arith.constant 0 : index
    %9 = vector.load %arg4[%c0_6, %c0_7] : memref<32x16xf32, #tpu.memory_space<vmem>>, vector<32x16xf32>
    %cst_8 = arith.constant dense<0.000000e+00> : vector<16x16xf32>
    %10 = tpu.matmul %8, %9, %cst_8 {dimension_numbers = #tpu.dot_dimension_numbers<[1], [0], [0], [1], [0, 0, 1, 1], [], []>} : vector<16x32xf32>, vector<32x16xf32>, vector<16x16xf32> -> vector<16x16xf32>
    %c0_9 = arith.constant 0 : index
    %c0_10 = arith.constant 0 : index
    %11 = vector.load %arg5[%c0_9, %c0_10] : memref<16x16xf32, #tpu.memory_space<vmem>>, vector<16x16xf32>
    %12 = arith.addf %10, %11 : vector<16x16xf32>
    %c0_11 = arith.constant 0 : index
    %c0_12 = arith.constant 0 : index
    %13 = vector.load %arg6[%c0_11, %c0_12] : memref<16x16xf32, #tpu.memory_space<vmem>>, vector<16x16xf32>
    tpu.vector_store %arg6[%c0_11, %c0_12], %12 {strides = array<i32>} : memref<16x16xf32, #tpu.memory_space<vmem>>, vector<16x16xf32>,
    return
  }
  func.func @transform_0(%arg0: i32) -> (i32, i32) {
    %c0_i32 = arith.constant 0 : i32
    %c0_i32_0 = arith.constant 0 : i32
    return %arg0, %c0_i32 : i32, i32
  }
  func.func @transform_1(%arg0: i32) -> (i32, i32) {
    %c0_i32 = arith.constant 0 : i32
    %c0_i32_0 = arith.constant 0 : i32
    %c0_i32_1 = arith.constant 0 : i32
    return %c0_i32, %c0_i32_0 : i32, i32
  }
  func.func @transform_2(%arg0: i32) -> (i32, i32) {
    %c0_i32 = arith.constant 0 : i32
    %c0_i32_0 = arith.constant 0 : i32
    %c0_i32_1 = arith.constant 0 : i32
    return %c0_i32, %c0_i32_0 : i32, i32
  }
  func.func @transform_3(%arg0: i32) -> (i32, i32) {
    %c0_i32 = arith.constant 0 : i32
    %c0_i32_0 = arith.constant 0 : i32
    %c0_i32_1 = arith.constant 0 : i32
    return %c0_i32, %c0_i32_0 : i32, i32
  }
  func.func @transform_4(%arg0: i32) -> (i32, i32) {
    %c0_i32 = arith.constant 0 : i32
    %c0_i32_0 = arith.constant 0 : i32
    return %arg0, %c0_i32 : i32, i32
  }
  func.func @transform_5(%arg0: i32) -> (i32, i32) {
    %c0_i32 = arith.constant 0 : i32
    %c0_i32_0 = arith.constant 0 : i32
    return %arg0, %c0_i32 : i32, i32
  }
}

</mosaic_0001>

<llo_original>
// kernel: decoder_forward.1
$region0: #{decoder_forward.1}
  #allocation0 [shape = 'u32[]', space=smem, size = 0x4, offset = 0x4, fixed_abs, tag = 'smem constant byte address 0x4 - core index']
  #allocation1 [shape = 'u32[144,128]{1,0:T(1,128)}', space=vmem, size = 0x12000, scoped, tag = 'internal scratch']
  %s0 = inlined_call_operand.vmem [shape: f32[16,32], index: 0, kind: input, shape index: {}]
  %s1 = inlined_call_operand.vmem [shape: f32[32,32], index: 1, kind: input, shape index: {}]
  %s2 = inlined_call_operand.vmem [shape: f32[1,32], index: 2, kind: input, shape index: {}]
  %s3 = inlined_call_operand.vmem [shape: f32[32,16], index: 3, kind: input, shape index: {}]
  %s4 = inlined_call_operand.hbm [shape: f32[16,16], index: 4, kind: input, shape index: {}]
  %s5 = inlined_call_operand.hbm [shape: f32[16,16], index: 5, kind: output, shape index: {}]
  %s6 = sld [smem:[#allocation0]]
  $region34: #{decoder_forward.1} parent=0
    _
  %s8 = ssub.s32 1, %s6
  %s9 = scalar_select 0, %s8, %s6
  $region1: #{decoder_forward.1} parent=0
    #allocation2 [shape = 'u8[8192]{0}', space=vmem, size = 0x2000, scoped, tag = 'input window, operand 4, single buffered']
    #allocation3 [shape = 's32[1]{0}', space=sflag, size = 0x4, scoped, tag = 'scoped memory for decoder_forward.1']
    #allocation4 [shape = 's32[1]{0}', space=sflag, size = 0x4, scoped, tag = 'scoped memory for decoder_forward.1']
    #allocation5 [shape = 'u8[8192]{0}', space=vmem, size = 0x2000, scoped, tag = 'output window, operand 0, single buffered']
    %10 = vsyncpa [#allocation3], 0
    %11 = vsyncpa [#allocation4], 0
    // Predicated region
    $region2: #{decoder_forward.1} parent=1 // pred_check
      _
    $region3: #{decoder_forward.1} parent=1 // pred_check_branch
      %13 = sbr.rel (0) target = $region5
    $region4: #{decoder_forward.1} parent=1 // pred_region
      _
    $region5: #{decoder_forward.1} parent=1 // pred_fallthru
      _
    // Predicated region
    $region6: #{decoder_forward.1} parent=1 // pred_check
      _
    $region7: #{decoder_forward.1} parent=1 // pred_check_branch
      %15 = sbr.rel (0) target = $region9
    $region8: #{decoder_forward.1} parent=1 // pred_region
      _
    $region9: #{decoder_forward.1} parent=1 // pred_fallthru
      _
    // Predicated region
    $region10: #{decoder_forward.1} parent=1 // pred_check
      _
    $region11: #{decoder_forward.1} parent=1 // pred_check_branch
      %17 = sbr.rel (0) target = $region13
    $region12: #{decoder_forward.1} parent=1 // pred_region
      _
    $region13: #{decoder_forward.1} parent=1 // pred_fallthru
      _
    // Predicated region
    $region14: #{decoder_forward.1} parent=1 // pred_check
      _
    $region15: #{decoder_forward.1} parent=1 // pred_check_branch
      %19 = sbr.rel (0) target = $region17
    $region16: #{decoder_forward.1} parent=1 // pred_region
      _
    $region17: #{decoder_forward.1} parent=1 // pred_fallthru
      _
    // Predicated region
    $region18: #{decoder_forward.1} parent=1 // pred_check
      _
    $region19: #{decoder_forward.1} parent=1 // pred_check_branch
      %21 = sbr.rel (0) target = $region21
    $region20: #{decoder_forward.1} parent=1 // pred_region
      %s23 = ssub.s32 256, 256
      %24 = vsyncadd [#allocation3], %s23
      %s25 = sshll.u32 [#allocation2], 4
      %s26 = int_to_ptr.vmem [resolvable:$true] %s25
      %31 = dma.hbm_to_vmem [thread:$0]  %s4, 256, %s26, [#allocation3], 128, 128, 8
    $region21: #{decoder_forward.1} parent=1 // pred_fallthru
      _
    // Predicated region
    $region22: #{decoder_forward.1} parent=1 // pred_check
      _
    $region23: #{decoder_forward.1} parent=1 // pred_check_branch
      %33 = sbr.rel (0) target = $region25
    $region24: #{decoder_forward.1} parent=1 // pred_region
      %34 = dma.done [#allocation3], 256
    $region25: #{decoder_forward.1} parent=1 // pred_fallthru
      _
    %v35 = vld [vmem:[%s0] sm:$0xff]
    %v36 = vld [vmem:[%s0 + $0x8] sm:$0xff]
    %v37 = vld [vmem:[%s1] sm:$0xff]
    %v38 = vld [vmem:[%s1 + $0x8] sm:$0xff]
    %v39 = vld [vmem:[%s1 + $0x10] sm:$0xff]
    %v40 = vld [vmem:[%s1 + $0x18] sm:$0xff]
    %v41 = vld [vmem:[%s2] sm:$0x1]
    %v43 = vlaneseq
    %v44 = vshrl.u32 %v43, 7
    %v45 = vsub.s32 0, %v44
    %v46 = vrot.slane %v41, %v45
    %vm48 = vcmask 261120
    %v50 = vsel %vm48, %v35, 0
    %v53 = vsel %vm48, %v36, 0
    %55 = vmatprep.subr.mxu0 0.0
    %56 = vmatpush1.msra.mxu0 0.0
    %57 = vmatprep.subr.mxu0 0.0
    %58 = vmatpush1.msra.mxu0 0.0
    %59 = vmatprep.subr.mxu0 0.0
    %60 = vmatpush1.msra.mxu0 0.0
    %61 = vmatprep.subr.mxu0 0.0
    %62 = vmatpush1.msra.mxu0 0.0
    %63 = vmatprep.subr.mxu0 0.0
    %64 = vmatpush1.msra.mxu0 0.0
    %65 = vmatprep.subr.mxu0 0.0
    %66 = vmatpush1.msra.mxu0 0.0
    %67 = vmatprep.subr.mxu0 0.0
    %68 = vmatpush1.msra.mxu0 0.0
    %69 = vmatprep.subr.mxu0 0.0
    %70 = vmatpush1.msra.mxu0 0.0
    %71 = vmatprep.subr.mxu0 0.0
    %72 = vmatpush1.msra.mxu0 0.0
    %73 = vmatprep.subr.mxu0 0.0
    %74 = vmatpush1.msra.mxu0 0.0
    %75 = vmatprep.subr.mxu0 0.0
    %76 = vmatpush1.msra.mxu0 0.0
    %77 = vmatprep.subr.mxu0 0.0
    %78 = vmatpush1.msra.mxu0 0.0
    %79 = vmatprep.subr.mxu0 0.0
    %80 = vmatpush1.msra.mxu0 %v40
    %81 = vmatprep.subr.mxu0 0.0
    %82 = vmatpush1.msra.mxu0 %v39
    %83 = vmatprep.subr.mxu0 0.0
    %84 = vmatpush1.msra.mxu0 %v38
    %85 = vmatprep.subr.mxu0 0.0
    %86 = vmatpush1.msra.mxu0 %v37
    %87 = vmatprep.subr.mxu0 0.0
    %88 = vmatpush2.msra.mxu0 0.0
    %89 = vmatprep.subr.mxu0 0.0
    %90 = vmatpush2.msra.mxu0 0.0
    %91 = vmatprep.subr.mxu0 0.0
    %92 = vmatpush2.msra.mxu0 0.0
    %93 = vmatprep.subr.mxu0 0.0
    %94 = vmatpush2.msra.mxu0 0.0
    %95 = vmatprep.subr.mxu0 0.0
    %96 = vmatpush2.msra.mxu0 0.0
    %97 = vmatprep.subr.mxu0 0.0
    %98 = vmatpush2.msra.mxu0 0.0
    %99 = vmatprep.subr.mxu0 0.0
    %100 = vmatpush2.msra.mxu0 0.0
    %101 = vmatprep.subr.mxu0 0.0
    %102 = vmatpush2.msra.mxu0 0.0
    %103 = vmatprep.subr.mxu0 0.0
    %104 = vmatpush2.msra.mxu0 0.0
    %105 = vmatprep.subr.mxu0 0.0
    %106 = vmatpush2.msra.mxu0 0.0
    %107 = vmatprep.subr.mxu0 0.0
    %108 = vmatpush2.msra.mxu0 0.0
    %109 = vmatprep.subr.mxu0 0.0
    %110 = vmatpush2.msra.mxu0 0.0
    %111 = vmatprep.subr.mxu0 0.0
    %112 = vmatpush2.msra.mxu0 0.0
    %113 = vmatprep.subr.mxu0 0.0
    %114 = vmatpush2.msra.mxu0 0.0
    %115 = vmatprep.subr.mxu0 0.0
    %116 = vmatpush2.msra.mxu0 0.0
    %117 = vmatprep.subr.mxu0 0.0
    %118 = vmatpush2.msra.mxu0 0.0
    %119 = vmatprep.mubr.f32.mxu0 0.0
    %120 = vmatmul.mubr.f32.gmra.mxu0 %v50
    %v121 = vpop.f32.mrf.mxu0
    %v122 = vadd.f32 %v46, %v121
    %v123 = vpop.f32.mrf.mxu0
    %124 = vmatprep.mubr.f32.mxu0 0.0
    %125 = vmatmul.mubr.f32.gmra.mxu0 %v53
    %v126 = vpop.f32.mrf.mxu0
    %v127 = vadd.f32 %v46, %v126
    %v128 = vpop.f32.mrf.mxu0
    %129 = vdwg.mxu0
    %v130 = vmul.f32 %v122, 0.1
    %v131 = vmul.f32 %v127, 0.1
    %v132 = vmax.f32 %v122, %v130
    %v133 = vmax.f32 %v127, %v131
    %v134 = vld [vmem:[%s3] sm:$0xff]
    %v135 = vld [vmem:[%s3 + $0x8] sm:$0xff]
    %v136 = vld [vmem:[%s3 + $0x10] sm:$0xff]
    %v137 = vld [vmem:[%s3 + $0x18] sm:$0xff]
    %v138 = vld [vmem:[#allocation2] sm:$0xff]
    %v139 = vld [vmem:[#allocation2 + $0x8] sm:$0xff]
    %v141 = vsel %vm48, %v132, 0
    %v144 = vsel %vm48, %v133, 0
    %146 = vmatprep.subr.mxu0 0.0
    %147 = vmatpush1.msra.mxu0 0.0
    %148 = vmatprep.subr.mxu0 0.0
    %149 = vmatpush1.msra.mxu0 0.0
    %150 = vmatprep.subr.mxu0 0.0
    %151 = vmatpush1.msra.mxu0 0.0
    %152 = vmatprep.subr.mxu0 0.0
    %153 = vmatpush1.msra.mxu0 0.0
    %154 = vmatprep.subr.mxu0 0.0
    %155 = vmatpush1.msra.mxu0 0.0
    %156 = vmatprep.subr.mxu0 0.0
    %157 = vmatpush1.msra.mxu0 0.0
    %158 = vmatprep.subr.mxu0 0.0
    %159 = vmatpush1.msra.mxu0 0.0
    %160 = vmatprep.subr.mxu0 0.0
    %161 = vmatpush1.msra.mxu0 0.0
    %162 = vmatprep.subr.mxu0 0.0
    %163 = vmatpush1.msra.mxu0 0.0
    %164 = vmatprep.subr.mxu0 0.0
    %165 = vmatpush1.msra.mxu0 0.0
    %166 = vmatprep.subr.mxu0 0.0
    %167 = vmatpush1.msra.mxu0 0.0
    %168 = vmatprep.subr.mxu0 0.0
    %169 = vmatpush1.msra.mxu0 0.0
    %170 = vmatprep.subr.mxu0 0.0
    %171 = vmatpush1.msra.mxu0 %v137
    %172 = vmatprep.subr.mxu0 0.0
    %173 = vmatpush1.msra.mxu0 %v136
    %174 = vmatprep.subr.mxu0 0.0
    %175 = vmatpush1.msra.mxu0 %v135
    %176 = vmatprep.subr.mxu0 0.0
    %177 = vmatpush1.msra.mxu0 %v134
    %178 = vmatprep.subr.mxu0 0.0
    %179 = vmatpush2.msra.mxu0 0.0
    %180 = vmatprep.subr.mxu0 0.0
    %181 = vmatpush2.msra.mxu0 0.0
    %182 = vmatprep.subr.mxu0 0.0
    %183 = vmatpush2.msra.mxu0 0.0
    %184 = vmatprep.subr.mxu0 0.0
    %185 = vmatpush2.msra.mxu0 0.0
    %186 = vmatprep.subr.mxu0 0.0
    %187 = vmatpush2.msra.mxu0 0.0
    %188 = vmatprep.subr.mxu0 0.0
    %189 = vmatpush2.msra.mxu0 0.0
    %190 = vmatprep.subr.mxu0 0.0
    %191 = vmatpush2.msra.mxu0 0.0
    %192 = vmatprep.subr.mxu0 0.0
    %193 = vmatpush2.msra.mxu0 0.0
    %194 = vmatprep.subr.mxu0 0.0
    %195 = vmatpush2.msra.mxu0 0.0
    %196 = vmatprep.subr.mxu0 0.0
    %197 = vmatpush2.msra.mxu0 0.0
    %198 = vmatprep.subr.mxu0 0.0
    %199 = vmatpush2.msra.mxu0 0.0
    %200 = vmatprep.subr.mxu0 0.0
    %201 = vmatpush2.msra.mxu0 0.0
    %202 = vmatprep.subr.mxu0 0.0
    %203 = vmatpush2.msra.mxu0 0.0
    %204 = vmatprep.subr.mxu0 0.0
    %205 = vmatpush2.msra.mxu0 0.0
    %206 = vmatprep.subr.mxu0 0.0
    %207 = vmatpush2.msra.mxu0 0.0
    %208 = vmatprep.subr.mxu0 0.0
    %209 = vmatpush2.msra.mxu0 0.0
    %210 = vmatprep.mubr.f32.mxu0 0.0
    %211 = vmatmul.mubr.f32.gmra.mxu0 %v141
    %v212 = vpop.f32.mrf.mxu0
    %v213 = vadd.f32 %v138, %v212
    %v214 = vpop.f32.mrf.mxu0
    %215 = vmatprep.mubr.f32.mxu0 0.0
    %216 = vmatmul.mubr.f32.gmra.mxu0 %v144
    %v217 = vpop.f32.mrf.mxu0
    %v218 = vadd.f32 %v139, %v217
    %v219 = vpop.f32.mrf.mxu0
    %220 = vdwg.mxu0
    %vm221 = vcmask 130048
    %222 = vst.msk [vmem:[#allocation5] sm:$0xff] %vm221, %v213
    %223 = vst.msk [vmem:[#allocation5 + $0x8] sm:$0xff] %vm221, %v218
    // Predicated region
    $region26: #{decoder_forward.1} parent=1 // pred_check
      _
    $region27: #{decoder_forward.1} parent=1 // pred_check_branch
      %225 = sbr.rel (0) target = $region29
    $region28: #{decoder_forward.1} parent=1 // pred_region
      %s227 = ssub.s32 256, 256
      %228 = vsyncadd [#allocation4], %s227
      %s229 = sshll.u32 [#allocation5], 4
      %s230 = int_to_ptr.vmem [resolvable:$true] %s229
      %235 = dma.vmem_to_hbm [thread:$0]  %s230, 256, %s5, [#allocation4], 128, 128, 8
    $region29: #{decoder_forward.1} parent=1 // pred_fallthru
      _
    // Predicated region
    $region30: #{decoder_forward.1} parent=1 // pred_check
      _
    $region31: #{decoder_forward.1} parent=1 // pred_check_branch
      %237 = sbr.rel (0) target = $region33
    $region32: #{decoder_forward.1} parent=1 // pred_region
      %238 = dma.done [#allocation4], 256
    $region33: #{decoder_forward.1} parent=1 // pred_fallthru
      _
    %239 = vsyncpa [#allocation3], 1
    %240 = vsyncpa [#allocation4], 1

</llo_original>
